<compile_context>
chip_gen: v5e
topology: v5e:2x2
jax: 0.10.0
libtpu: 0.0.40
codegen_flags: <defaults>
</compile_context>

<pallas_src>
import jax
import jax.numpy as jnp
from jax.experimental import pallas as pl
from jax.experimental.pallas import tpu as pltpu


def embedding_gather_kernel(ids_ref, table_hbm, out_ref, sem):
    """Gather TM embedding rows directly from HBM into the output VMEM block.

    ids_ref   : SMEM (N_padded,) int32 — scalar-prefetched token ids.
    table_hbm : HBM  (V, D)      — full table, never copied wholesale to VMEM.
    out_ref   : VMEM (TM, D)     — output block for this grid step.
    sem       : DMA semaphores, one per in-flight row copy.
    """
    blk = pl.program_id(0)
    tm = out_ref.shape[0]
    base = blk * tm

    copies = []
    for t in range(tm):  # static unroll: TM independent, overlapping row DMAs
        row = ids_ref[base + t]
        cp = pltpu.make_async_copy(
            table_hbm.at[pl.ds(row, 1), :],   # (1, D) row in HBM
            out_ref.at[pl.ds(t, 1), :],       # (1, D) slot in the output block
            sem.at[t],
        )
        cp.start()
        copies.append(cp)
    for cp in copies:
        cp.wait()


def embedding_lookup(ids_flat, table, *, tm=128):
    """Gather rows of `table` at `ids_flat` -> (N, D)."""
    n = ids_flat.shape[0]
    v, d = table.shape

    # Block of tokens per grid step: multiple of 8 (sublane tiling of the
    # output block), no larger than the padded token count for tiny inputs.
    n_pad8 = ((n + 7) // 8) * 8
    tm = max(8, min(tm, n_pad8))
    tm = ((tm + 7) // 8) * 8

    n_pad = (-n) % tm
    ids_p = jnp.pad(ids_flat.astype(jnp.int32), (0, n_pad))
    n_p = ids_p.shape[0]

    out = pl.pallas_call(
        embedding_gather_kernel,
        out_shape=jax.ShapeDtypeStruct((n_p, d), table.dtype),
        grid_spec=pltpu.PrefetchScalarGridSpec(
            num_scalar_prefetch=1,                       # ids -> SMEM
            grid=(n_p // tm,),
            in_specs=[
                pl.BlockSpec(memory_space=pl.ANY),       # table stays in HBM
            ],
            out_specs=pl.BlockSpec((tm, d), lambda i, ids: (i, 0)),
            scratch_shapes=[pltpu.SemaphoreType.DMA((tm,))],
        ),
        compiler_params=pltpu.CompilerParams(
            dimension_semantics=("parallel",),
        ),
    )(ids_p, table)
    return out[:n]


class Embedding:
    """JAX/Pallas equivalent of the PyTorch Embedding module."""

    def __init__(self, vocab_size, embed_dim, key):
        # nn.Embedding default init: N(0, 1), float32 (kept f32 to match PyTorch
        # numerics; a bf16 table would halve HBM traffic if exactness is not needed).
        self.table = jax.random.normal(
            key, (vocab_size, embed_dim), dtype=jnp.float32
        )

    def __call__(self, x):
        b, s = x.shape
        flat = x.reshape(-1)
        out = embedding_lookup(flat, self.table)
        return out.reshape(b, s, self.table.shape[1])


if __name__ == "__main__":
    key = jax.random.PRNGKey(0)
    k_tab, k_idx = jax.random.split(key)

    vocab_size, embed_dim = 64, 128
    B, S = 2, 8

    mod = Embedding(vocab_size, embed_dim, k_tab)
    x = jax.random.randint(k_idx, (B, S), 0, vocab_size, dtype=jnp.int32)

    out = mod(x)
    out = jax.block_until_ready(out)

    # sanity check against plain-JAX gather
    ref = jnp.take(mod.table, x, axis=0)
    assert out.shape == (B, S, embed_dim)
    assert out.dtype == jnp.float32
    assert jnp.allclose(out, ref, atol=1e-6)

    print("KERNEL_OK")
</pallas_src>

<mosaic_0001>
module attributes {stable_mosaic.version = 11 : i64} {
  func.func @embedding_gather_kernel(%arg0: i32, %arg1: memref<16xi32, #tpu.memory_space<smem>>, %arg2: memref<64x128xf32, #tpu.memory_space<any>>, %arg3: memref<16x128xf32, #tpu.memory_space<vmem>>, %arg4: memref<16x!tpu.dma_semaphore, #tpu.memory_space<semaphore_mem>>) attributes {dimension_semantics = [#tpu.dimension_semantics<parallel>], iteration_bounds = array<i64: 1>, scalar_prefetch = 1 : i64, scratch_operands = 1 : i64, tpu.core_type = #tpu.core_type<tc>, window_params = [{}, {transform_indices = @transform_1, window_bounds = array<i64: 16, 128>}]} {
    %c16_i32 = arith.constant 16 : i32
    %0 = arith.muli %arg0, %c16_i32 : i32
    %c0_i32 = arith.constant 0 : i32
    %1 = arith.addi %0, %c0_i32 : i32
    %2 = arith.index_cast %1 : i32 to index
    %3 = memref.load %arg1[%2] : memref<16xi32, #tpu.memory_space<smem>>
    %c0_i32_0 = arith.constant 0 : i32
    %c0_i32_1 = arith.constant 0 : i32
    %4 = tpu.memref_slice %arg2[%3, %c0_i32_1] : memref<64x128xf32, #tpu.memory_space<any>> -> memref<1x128xf32, #tpu.memory_space<any>>
    %c0_i32_2 = arith.constant 0 : i32
    %c0_i32_3 = arith.constant 0 : i32
    %5 = tpu.memref_slice %arg3[%c0_i32_2, %c0_i32_3] : memref<16x128xf32, #tpu.memory_space<vmem>> -> memref<1x128xf32, #tpu.memory_space<vmem>>
    %6 = tpu.memref_slice %arg4[%c0_i32_0] : memref<16x!tpu.dma_semaphore, #tpu.memory_space<semaphore_mem>> -> memref<1x!tpu.dma_semaphore, #tpu.memory_space<semaphore_mem>>
    %7 = tpu.memref_squeeze %6 : memref<1x!tpu.dma_semaphore, #tpu.memory_space<semaphore_mem>> -> memref<!tpu.dma_semaphore, #tpu.memory_space<semaphore_mem>>
    tpu.enqueue_dma source(%4 : memref<1x128xf32, #tpu.memory_space<any>>) target(%5 : memref<1x128xf32, #tpu.memory_space<vmem>>) target_semaphore(%7 : memref<!tpu.dma_semaphore, #tpu.memory_space<semaphore_mem>>)
    %c1_i32 = arith.constant 1 : i32
    %8 = arith.addi %0, %c1_i32 : i32
    %9 = arith.index_cast %8 : i32 to index
    %10 = memref.load %arg1[%9] : memref<16xi32, #tpu.memory_space<smem>>
    %c1_i32_4 = arith.constant 1 : i32
    %c0_i32_5 = arith.constant 0 : i32
    %11 = tpu.memref_slice %arg2[%10, %c0_i32_5] : memref<64x128xf32, #tpu.memory_space<any>> -> memref<1x128xf32, #tpu.memory_space<any>>
    %c1_i32_6 = arith.constant 1 : i32
    %c0_i32_7 = arith.constant 0 : i32
    %12 = tpu.memref_slice %arg3[%c1_i32_6, %c0_i32_7] : memref<16x128xf32, #tpu.memory_space<vmem>> -> memref<1x128xf32, #tpu.memory_space<vmem>>
    %13 = tpu.memref_slice %arg4[%c1_i32_4] : memref<16x!tpu.dma_semaphore, #tpu.memory_space<semaphore_mem>> -> memref<1x!tpu.dma_semaphore, #tpu.memory_space<semaphore_mem>>
    %14 = tpu.memref_squeeze %13 : memref<1x!tpu.dma_semaphore, #tpu.memory_space<semaphore_mem>> -> memref<!tpu.dma_semaphore, #tpu.memory_space<semaphore_mem>>
    tpu.enqueue_dma source(%11 : memref<1x128xf32, #tpu.memory_space<any>>) target(%12 : memref<1x128xf32, #tpu.memory_space<vmem>>) target_semaphore(%14 : memref<!tpu.dma_semaphore, #tpu.memory_space<semaphore_mem>>)
    %c2_i32 = arith.constant 2 : i32
    %15 = arith.addi %0, %c2_i32 : i32
    %16 = arith.index_cast %15 : i32 to index
    %17 = memref.load %arg1[%16] : memref<16xi32, #tpu.memory_space<smem>>
    %c2_i32_8 = arith.constant 2 : i32
    %c0_i32_9 = arith.constant 0 : i32
    %18 = tpu.memref_slice %arg2[%17, %c0_i32_9] : memref<64x128xf32, #tpu.memory_space<any>> -> memref<1x128xf32, #tpu.memory_space<any>>
    %c2_i32_10 = arith.constant 2 : i32
    %c0_i32_11 = arith.constant 0 : i32
    %19 = tpu.memref_slice %arg3[%c2_i32_10, %c0_i32_11] : memref<16x128xf32, #tpu.memory_space<vmem>> -> memref<1x128xf32, #tpu.memory_space<vmem>>
    %20 = tpu.memref_slice %arg4[%c2_i32_8] : memref<16x!tpu.dma_semaphore, #tpu.memory_space<semaphore_mem>> -> memref<1x!tpu.dma_semaphore, #tpu.memory_space<semaphore_mem>>
    %21 = tpu.memref_squeeze %20 : memref<1x!tpu.dma_semaphore, #tpu.memory_space<semaphore_mem>> -> memref<!tpu.dma_semaphore, #tpu.memory_space<semaphore_mem>>
    tpu.enqueue_dma source(%18 : memref<1x128xf32, #tpu.memory_space<any>>) target(%19 : memref<1x128xf32, #tpu.memory_space<vmem>>) target_semaphore(%21 : memref<!tpu.dma_semaphore, #tpu.memory_space<semaphore_mem>>)
    %c3_i32 = arith.constant 3 : i32
    %22 = arith.addi %0, %c3_i32 : i32
    %23 = arith.index_cast %22 : i32 to index
    %24 = memref.load %arg1[%23] : memref<16xi32, #tpu.memory_space<smem>>
    %c3_i32_12 = arith.constant 3 : i32
    %c0_i32_13 = arith.constant 0 : i32
    %25 = tpu.memref_slice %arg2[%24, %c0_i32_13] : memref<64x128xf32, #tpu.memory_space<any>> -> memref<1x128xf32, #tpu.memory_space<any>>
    %c3_i32_14 = arith.constant 3 : i32
    %c0_i32_15 = arith.constant 0 : i32
    %26 = tpu.memref_slice %arg3[%c3_i32_14, %c0_i32_15] : memref<16x128xf32, #tpu.memory_space<vmem>> -> memref<1x128xf32, #tpu.memory_space<vmem>>
    %27 = tpu.memref_slice %arg4[%c3_i32_12] : memref<16x!tpu.dma_semaphore, #tpu.memory_space<semaphore_mem>> -> memref<1x!tpu.dma_semaphore, #tpu.memory_space<semaphore_mem>>
    %28 = tpu.memref_squeeze %27 : memref<1x!tpu.dma_semaphore, #tpu.memory_space<semaphore_mem>> -> memref<!tpu.dma_semaphore, #tpu.memory_space<semaphore_mem>>
    tpu.enqueue_dma source(%25 : memref<1x128xf32, #tpu.memory_space<any>>) target(%26 : memref<1x128xf32, #tpu.memory_space<vmem>>) target_semaphore(%28 : memref<!tpu.dma_semaphore, #tpu.memory_space<semaphore_mem>>)
    %c4_i32 = arith.constant 4 : i32
    %29 = arith.addi %0, %c4_i32 : i32
    %30 = arith.index_cast %29 : i32 to index
    %31 = memref.load %arg1[%30] : memref<16xi32, #tpu.memory_space<smem>>
    %c4_i32_16 = arith.constant 4 : i32
    %c0_i32_17 = arith.constant 0 : i32
    %32 = tpu.memref_slice %arg2[%31, %c0_i32_17] : memref<64x128xf32, #tpu.memory_space<any>> -> memref<1x128xf32, #tpu.memory_space<any>>
    %c4_i32_18 = arith.constant 4 : i32
    %c0_i32_19 = arith.constant 0 : i32
    %33 = tpu.memref_slice %arg3[%c4_i32_18, %c0_i32_19] : memref<16x128xf32, #tpu.memory_space<vmem>> -> memref<1x128xf32, #tpu.memory_space<vmem>>
    %34 = tpu.memref_slice %arg4[%c4_i32_16] : memref<16x!tpu.dma_semaphore, #tpu.memory_space<semaphore_mem>> -> memref<1x!tpu.dma_semaphore, #tpu.memory_space<semaphore_mem>>
    %35 = tpu.memref_squeeze %34 : memref<1x!tpu.dma_semaphore, #tpu.memory_space<semaphore_mem>> -> memref<!tpu.dma_semaphore, #tpu.memory_space<semaphore_mem>>
    tpu.enqueue_dma source(%32 : memref<1x128xf32, #tpu.memory_space<any>>) target(%33 : memref<1x128xf32, #tpu.memory_space<vmem>>) target_semaphore(%35 : memref<!tpu.dma_semaphore, #tpu.memory_space<semaphore_mem>>)
    %c5_i32 = arith.constant 5 : i32
    %36 = arith.addi %0, %c5_i32 : i32
    %37 = arith.index_cast %36 : i32 to index
    %38 = memref.load %arg1[%37] : memref<16xi32, #tpu.memory_space<smem>>
    %c5_i32_20 = arith.constant 5 : i32
    %c0_i32_21 = arith.constant 0 : i32
    %39 = tpu.memref_slice %arg2[%38, %c0_i32_21] : memref<64x128xf32, #tpu.memory_space<any>> -> memref<1x128xf32, #tpu.memory_space<any>>
    %c5_i32_22 = arith.constant 5 : i32
    %c0_i32_23 = arith.constant 0 : i32
    %40 = tpu.memref_slice %arg3[%c5_i32_22, %c0_i32_23] : memref<16x128xf32, #tpu.memory_space<vmem>> -> memref<1x128xf32, #tpu.memory_space<vmem>>
    %41 = tpu.memref_slice %arg4[%c5_i32_20] : memref<16x!tpu.dma_semaphore, #tpu.memory_space<semaphore_mem>> -> memref<1x!tpu.dma_semaphore, #tpu.memory_space<semaphore_mem>>
    %42 = tpu.memref_squeeze %41 : memref<1x!tpu.dma_semaphore, #tpu.memory_space<semaphore_mem>> -> memref<!tpu.dma_semaphore, #tpu.memory_space<semaphore_mem>>
    tpu.enqueue_dma source(%39 : memref<1x128xf32, #tpu.memory_space<any>>) target(%40 : memref<1x128xf32, #tpu.memory_space<vmem>>) target_semaphore(%42 : memref<!tpu.dma_semaphore, #tpu.memory_space<semaphore_mem>>)
    %c6_i32 = arith.constant 6 : i32
    %43 = arith.addi %0, %c6_i32 : i32
    %44 = arith.index_cast %43 : i32 to index
    %45 = memref.load %arg1[%44] : memref<16xi32, #tpu.memory_space<smem>>
    %c6_i32_24 = arith.constant 6 : i32
    %c0_i32_25 = arith.constant 0 : i32
    %46 = tpu.memref_slice %arg2[%45, %c0_i32_25] : memref<64x128xf32, #tpu.memory_space<any>> -> memref<1x128xf32, #tpu.memory_space<any>>
    %c6_i32_26 = arith.constant 6 : i32
    %c0_i32_27 = arith.constant 0 : i32
    %47 = tpu.memref_slice %arg3[%c6_i32_26, %c0_i32_27] : memref<16x128xf32, #tpu.memory_space<vmem>> -> memref<1x128xf32, #tpu.memory_space<vmem>>
    %48 = tpu.memref_slice %arg4[%c6_i32_24] : memref<16x!tpu.dma_semaphore, #tpu.memory_space<semaphore_mem>> -> memref<1x!tpu.dma_semaphore, #tpu.memory_space<semaphore_mem>>
    %49 = tpu.memref_squeeze %48 : memref<1x!tpu.dma_semaphore, #tpu.memory_space<semaphore_mem>> -> memref<!tpu.dma_semaphore, #tpu.memory_space<semaphore_mem>>
    tpu.enqueue_dma source(%46 : memref<1x128xf32, #tpu.memory_space<any>>) target(%47 : memref<1x128xf32, #tpu.memory_space<vmem>>) target_semaphore(%49 : memref<!tpu.dma_semaphore, #tpu.memory_space<semaphore_mem>>)
    %c7_i32 = arith.constant 7 : i32
    %50 = arith.addi %0, %c7_i32 : i32
    %51 = arith.index_cast %50 : i32 to index
    %52 = memref.load %arg1[%51] : memref<16xi32, #tpu.memory_space<smem>>
    %c7_i32_28 = arith.constant 7 : i32
    %c0_i32_29 = arith.constant 0 : i32
    %53 = tpu.memref_slice %arg2[%52, %c0_i32_29] : memref<64x128xf32, #tpu.memory_space<any>> -> memref<1x128xf32, #tpu.memory_space<any>>
    %c7_i32_30 = arith.constant 7 : i32
    %c0_i32_31 = arith.constant 0 : i32
    %54 = tpu.memref_slice %arg3[%c7_i32_30, %c0_i32_31] : memref<16x128xf32, #tpu.memory_space<vmem>> -> memref<1x128xf32, #tpu.memory_space<vmem>>
    %55 = tpu.memref_slice %arg4[%c7_i32_28] : memref<16x!tpu.dma_semaphore, #tpu.memory_space<semaphore_mem>> -> memref<1x!tpu.dma_semaphore, #tpu.memory_space<semaphore_mem>>
    %56 = tpu.memref_squeeze %55 : memref<1x!tpu.dma_semaphore, #tpu.memory_space<semaphore_mem>> -> memref<!tpu.dma_semaphore, #tpu.memory_space<semaphore_mem>>
    tpu.enqueue_dma source(%53 : memref<1x128xf32, #tpu.memory_space<any>>) target(%54 : memref<1x128xf32, #tpu.memory_space<vmem>>) target_semaphore(%56 : memref<!tpu.dma_semaphore, #tpu.memory_space<semaphore_mem>>)
    %c8_i32 = arith.constant 8 : i32
    %57 = arith.addi %0, %c8_i32 : i32
    %58 = arith.index_cast %57 : i32 to index
    %59 = memref.load %arg1[%58] : memref<16xi32, #tpu.memory_space<smem>>
    %c8_i32_32 = arith.constant 8 : i32
    %c0_i32_33 = arith.constant 0 : i32
    %60 = tpu.memref_slice %arg2[%59, %c0_i32_33] : memref<64x128xf32, #tpu.memory_space<any>> -> memref<1x128xf32, #tpu.memory_space<any>>
    %c8_i32_34 = arith.constant 8 : i32
    %c0_i32_35 = arith.constant 0 : i32
    %61 = tpu.memref_slice %arg3[%c8_i32_34, %c0_i32_35] : memref<16x128xf32, #tpu.memory_space<vmem>> -> memref<1x128xf32, #tpu.memory_space<vmem>>
    %62 = tpu.memref_slice %arg4[%c8_i32_32] : memref<16x!tpu.dma_semaphore, #tpu.memory_space<semaphore_mem>> -> memref<1x!tpu.dma_semaphore, #tpu.memory_space<semaphore_mem>>
    %63 = tpu.memref_squeeze %62 : memref<1x!tpu.dma_semaphore, #tpu.memory_space<semaphore_mem>> -> memref<!tpu.dma_semaphore, #tpu.memory_space<semaphore_mem>>
    tpu.enqueue_dma source(%60 : memref<1x128xf32, #tpu.memory_space<any>>) target(%61 : memref<1x128xf32, #tpu.memory_space<vmem>>) target_semaphore(%63 : memref<!tpu.dma_semaphore, #tpu.memory_space<semaphore_mem>>)
    %c9_i32 = arith.constant 9 : i32
    %64 = arith.addi %0, %c9_i32 : i32
    %65 = arith.index_cast %64 : i32 to index
    %66 = memref.load %arg1[%65] : memref<16xi32, #tpu.memory_space<smem>>
    %c9_i32_36 = arith.constant 9 : i32
    %c0_i32_37 = arith.constant 0 : i32
    %67 = tpu.memref_slice %arg2[%66, %c0_i32_37] : memref<64x128xf32, #tpu.memory_space<any>> -> memref<1x128xf32, #tpu.memory_space<any>>
    %c9_i32_38 = arith.constant 9 : i32
    %c0_i32_39 = arith.constant 0 : i32
    %68 = tpu.memref_slice %arg3[%c9_i32_38, %c0_i32_39] : memref<16x128xf32, #tpu.memory_space<vmem>> -> memref<1x128xf32, #tpu.memory_space<vmem>>
    %69 = tpu.memref_slice %arg4[%c9_i32_36] : memref<16x!tpu.dma_semaphore, #tpu.memory_space<semaphore_mem>> -> memref<1x!tpu.dma_semaphore, #tpu.memory_space<semaphore_mem>>
    %70 = tpu.memref_squeeze %69 : memref<1x!tpu.dma_semaphore, #tpu.memory_space<semaphore_mem>> -> memref<!tpu.dma_semaphore, #tpu.memory_space<semaphore_mem>>
    tpu.enqueue_dma source(%67 : memref<1x128xf32, #tpu.memory_space<any>>) target(%68 : memref<1x128xf32, #tpu.memory_space<vmem>>) target_semaphore(%70 : memref<!tpu.dma_semaphore, #tpu.memory_space<semaphore_mem>>)
    %c10_i32 = arith.constant 10 : i32
    %71 = arith.addi %0, %c10_i32 : i32
    %72 = arith.index_cast %71 : i32 to index
    %73 = memref.load %arg1[%72] : memref<16xi32, #tpu.memory_space<smem>>
    %c10_i32_40 = arith.constant 10 : i32
    %c0_i32_41 = arith.constant 0 : i32
    %74 = tpu.memref_slice %arg2[%73, %c0_i32_41] : memref<64x128xf32, #tpu.memory_space<any>> -> memref<1x128xf32, #tpu.memory_space<any>>
    %c10_i32_42 = arith.constant 10 : i32
    %c0_i32_43 = arith.constant 0 : i32
    %75 = tpu.memref_slice %arg3[%c10_i32_42, %c0_i32_43] : memref<16x128xf32, #tpu.memory_space<vmem>> -> memref<1x128xf32, #tpu.memory_space<vmem>>
    %76 = tpu.memref_slice %arg4[%c10_i32_40] : memref<16x!tpu.dma_semaphore, #tpu.memory_space<semaphore_mem>> -> memref<1x!tpu.dma_semaphore, #tpu.memory_space<semaphore_mem>>
    %77 = tpu.memref_squeeze %76 : memref<1x!tpu.dma_semaphore, #tpu.memory_space<semaphore_mem>> -> memref<!tpu.dma_semaphore, #tpu.memory_space<semaphore_mem>>
    tpu.enqueue_dma source(%74 : memref<1x128xf32, #tpu.memory_space<any>>) target(%75 : memref<1x128xf32, #tpu.memory_space<vmem>>) target_semaphore(%77 : memref<!tpu.dma_semaphore, #tpu.memory_space<semaphore_mem>>)
    %c11_i32 = arith.constant 11 : i32
    %78 = arith.addi %0, %c11_i32 : i32
    %79 = arith.index_cast %78 : i32 to index
    %80 = memref.load %arg1[%79] : memref<16xi32, #tpu.memory_space<smem>>
    %c11_i32_44 = arith.constant 11 : i32
    %c0_i32_45 = arith.constant 0 : i32
    %81 = tpu.memref_slice %arg2[%80, %c0_i32_45] : memref<64x128xf32, #tpu.memory_space<any>> -> memref<1x128xf32, #tpu.memory_space<any>>
    %c11_i32_46 = arith.constant 11 : i32
    %c0_i32_47 = arith.constant 0 : i32
    %82 = tpu.memref_slice %arg3[%c11_i32_46, %c0_i32_47] : memref<16x128xf32, #tpu.memory_space<vmem>> -> memref<1x128xf32, #tpu.memory_space<vmem>>
    %83 = tpu.memref_slice %arg4[%c11_i32_44] : memref<16x!tpu.dma_semaphore, #tpu.memory_space<semaphore_mem>> -> memref<1x!tpu.dma_semaphore, #tpu.memory_space<semaphore_mem>>
    %84 = tpu.memref_squeeze %83 : memref<1x!tpu.dma_semaphore, #tpu.memory_space<semaphore_mem>> -> memref<!tpu.dma_semaphore, #tpu.memory_space<semaphore_mem>>
    tpu.enqueue_dma source(%81 : memref<1x128xf32, #tpu.memory_space<any>>) target(%82 : memref<1x128xf32, #tpu.memory_space<vmem>>) target_semaphore(%84 : memref<!tpu.dma_semaphore, #tpu.memory_space<semaphore_mem>>)
    %c12_i32 = arith.constant 12 : i32
    %85 = arith.addi %0, %c12_i32 : i32
    %86 = arith.index_cast %85 : i32 to index
    %87 = memref.load %arg1[%86] : memref<16xi32, #tpu.memory_space<smem>>
    %c12_i32_48 = arith.constant 12 : i32
    %c0_i32_49 = arith.constant 0 : i32
    %88 = tpu.memref_slice %arg2[%87, %c0_i32_49] : memref<64x128xf32, #tpu.memory_space<any>> -> memref<1x128xf32, #tpu.memory_space<any>>
    %c12_i32_50 = arith.constant 12 : i32
    %c0_i32_51 = arith.constant 0 : i32
    %89 = tpu.memref_slice %arg3[%c12_i32_50, %c0_i32_51] : memref<16x128xf32, #tpu.memory_space<vmem>> -> memref<1x128xf32, #tpu.memory_space<vmem>>
    %90 = tpu.memref_slice %arg4[%c12_i32_48] : memref<16x!tpu.dma_semaphore, #tpu.memory_space<semaphore_mem>> -> memref<1x!tpu.dma_semaphore, #tpu.memory_space<semaphore_mem>>
    %91 = tpu.memref_squeeze %90 : memref<1x!tpu.dma_semaphore, #tpu.memory_space<semaphore_mem>> -> memref<!tpu.dma_semaphore, #tpu.memory_space<semaphore_mem>>
    tpu.enqueue_dma source(%88 : memref<1x128xf32, #tpu.memory_space<any>>) target(%89 : memref<1x128xf32, #tpu.memory_space<vmem>>) target_semaphore(%91 : memref<!tpu.dma_semaphore, #tpu.memory_space<semaphore_mem>>)
    %c13_i32 = arith.constant 13 : i32
    %92 = arith.addi %0, %c13_i32 : i32
    %93 = arith.index_cast %92 : i32 to index
    %94 = memref.load %arg1[%93] : memref<16xi32, #tpu.memory_space<smem>>
    %c13_i32_52 = arith.constant 13 : i32
    %c0_i32_53 = arith.constant 0 : i32
    %95 = tpu.memref_slice %arg2[%94, %c0_i32_53] : memref<64x128xf32, #tpu.memory_space<any>> -> memref<1x128xf32, #tpu.memory_space<any>>
    %c13_i32_54 = arith.constant 13 : i32
    %c0_i32_55 = arith.constant 0 : i32
    %96 = tpu.memref_slice %arg3[%c13_i32_54, %c0_i32_55] : memref<16x128xf32, #tpu.memory_space<vmem>> -> memref<1x128xf32, #tpu.memory_space<vmem>>
    %97 = tpu.memref_slice %arg4[%c13_i32_52] : memref<16x!tpu.dma_semaphore, #tpu.memory_space<semaphore_mem>> -> memref<1x!tpu.dma_semaphore, #tpu.memory_space<semaphore_mem>>
    %98 = tpu.memref_squeeze %97 : memref<1x!tpu.dma_semaphore, #tpu.memory_space<semaphore_mem>> -> memref<!tpu.dma_semaphore, #tpu.memory_space<semaphore_mem>>
    tpu.enqueue_dma source(%95 : memref<1x128xf32, #tpu.memory_space<any>>) target(%96 : memref<1x128xf32, #tpu.memory_space<vmem>>) target_semaphore(%98 : memref<!tpu.dma_semaphore, #tpu.memory_space<semaphore_mem>>)
    %c14_i32 = arith.constant 14 : i32
    %99 = arith.addi %0, %c14_i32 : i32
    %100 = arith.index_cast %99 : i32 to index
    %101 = memref.load %arg1[%100] : memref<16xi32, #tpu.memory_space<smem>>
    %c14_i32_56 = arith.constant 14 : i32
    %c0_i32_57 = arith.constant 0 : i32
    %102 = tpu.memref_slice %arg2[%101, %c0_i32_57] : memref<64x128xf32, #tpu.memory_space<any>> -> memref<1x128xf32, #tpu.memory_space<any>>
    %c14_i32_58 = arith.constant 14 : i32
    %c0_i32_59 = arith.constant 0 : i32
    %103 = tpu.memref_slice %arg3[%c14_i32_58, %c0_i32_59] : memref<16x128xf32, #tpu.memory_space<vmem>> -> memref<1x128xf32, #tpu.memory_space<vmem>>
    %104 = tpu.memref_slice %arg4[%c14_i32_56] : memref<16x!tpu.dma_semaphore, #tpu.memory_space<semaphore_mem>> -> memref<1x!tpu.dma_semaphore, #tpu.memory_space<semaphore_mem>>
    %105 = tpu.memref_squeeze %104 : memref<1x!tpu.dma_semaphore, #tpu.memory_space<semaphore_mem>> -> memref<!tpu.dma_semaphore, #tpu.memory_space<semaphore_mem>>
    tpu.enqueue_dma source(%102 : memref<1x128xf32, #tpu.memory_space<any>>) target(%103 : memref<1x128xf32, #tpu.memory_space<vmem>>) target_semaphore(%105 : memref<!tpu.dma_semaphore, #tpu.memory_space<semaphore_mem>>)
    %c15_i32 = arith.constant 15 : i32
    %106 = arith.addi %0, %c15_i32 : i32
    %107 = arith.index_cast %106 : i32 to index
    %108 = memref.load %arg1[%107] : memref<16xi32, #tpu.memory_space<smem>>
    %c15_i32_60 = arith.constant 15 : i32
    %c0_i32_61 = arith.constant 0 : i32
    %109 = tpu.memref_slice %arg2[%108, %c0_i32_61] : memref<64x128xf32, #tpu.memory_space<any>> -> memref<1x128xf32, #tpu.memory_space<any>>
    %c15_i32_62 = arith.constant 15 : i32
    %c0_i32_63 = arith.constant 0 : i32
    %110 = tpu.memref_slice %arg3[%c15_i32_62, %c0_i32_63] : memref<16x128xf32, #tpu.memory_space<vmem>> -> memref<1x128xf32, #tpu.memory_space<vmem>>
    %111 = tpu.memref_slice %arg4[%c15_i32_60] : memref<16x!tpu.dma_semaphore, #tpu.memory_space<semaphore_mem>> -> memref<1x!tpu.dma_semaphore, #tpu.memory_space<semaphore_mem>>
    %112 = tpu.memref_squeeze %111 : memref<1x!tpu.dma_semaphore, #tpu.memory_space<semaphore_mem>> -> memref<!tpu.dma_semaphore, #tpu.memory_space<semaphore_mem>>
    tpu.enqueue_dma source(%109 : memref<1x128xf32, #tpu.memory_space<any>>) target(%110 : memref<1x128xf32, #tpu.memory_space<vmem>>) target_semaphore(%112 : memref<!tpu.dma_semaphore, #tpu.memory_space<semaphore_mem>>)
    %c0_i32_64 = arith.constant 0 : i32
    %c0_i32_65 = arith.constant 0 : i32
    %113 = tpu.memref_slice %arg2[%3, %c0_i32_65] : memref<64x128xf32, #tpu.memory_space<any>> -> memref<1x128xf32, #tpu.memory_space<any>>
    %c0_i32_66 = arith.constant 0 : i32
    %c0_i32_67 = arith.constant 0 : i32
    %114 = tpu.memref_slice %arg3[%c0_i32_66, %c0_i32_67] : memref<16x128xf32, #tpu.memory_space<vmem>> -> memref<1x128xf32, #tpu.memory_space<vmem>>
    %115 = tpu.memref_slice %arg4[%c0_i32_64] : memref<16x!tpu.dma_semaphore, #tpu.memory_space<semaphore_mem>> -> memref<1x!tpu.dma_semaphore, #tpu.memory_space<semaphore_mem>>
    %116 = tpu.memref_squeeze %115 : memref<1x!tpu.dma_semaphore, #tpu.memory_space<semaphore_mem>> -> memref<!tpu.dma_semaphore, #tpu.memory_space<semaphore_mem>>
    tpu.wait_dma2 semaphore(%116 : memref<!tpu.dma_semaphore, #tpu.memory_space<semaphore_mem>>) src(%113 : memref<1x128xf32, #tpu.memory_space<any>>) dst(%114 : memref<1x128xf32, #tpu.memory_space<vmem>>)
    %c1_i32_68 = arith.constant 1 : i32
    %c0_i32_69 = arith.constant 0 : i32
    %117 = tpu.memref_slice %arg2[%10, %c0_i32_69] : memref<64x128xf32, #tpu.memory_space<any>> -> memref<1x128xf32, #tpu.memory_space<any>>
    %c1_i32_70 = arith.constant 1 : i32
    %c0_i32_71 = arith.constant 0 : i32
    %118 = tpu.memref_slice %arg3[%c1_i32_70, %c0_i32_71] : memref<16x128xf32, #tpu.memory_space<vmem>> -> memref<1x128xf32, #tpu.memory_space<vmem>>
    %119 = tpu.memref_slice %arg4[%c1_i32_68] : memref<16x!tpu.dma_semaphore, #tpu.memory_space<semaphore_mem>> -> memref<1x!tpu.dma_semaphore, #tpu.memory_space<semaphore_mem>>
    %120 = tpu.memref_squeeze %119 : memref<1x!tpu.dma_semaphore, #tpu.memory_space<semaphore_mem>> -> memref<!tpu.dma_semaphore, #tpu.memory_space<semaphore_mem>>
    tpu.wait_dma2 semaphore(%120 : memref<!tpu.dma_semaphore, #tpu.memory_space<semaphore_mem>>) src(%117 : memref<1x128xf32, #tpu.memory_space<any>>) dst(%118 : memref<1x128xf32, #tpu.memory_space<vmem>>)
    %c2_i32_72 = arith.constant 2 : i32
    %c0_i32_73 = arith.constant 0 : i32
    %121 = tpu.memref_slice %arg2[%17, %c0_i32_73] : memref<64x128xf32, #tpu.memory_space<any>> -> memref<1x128xf32, #tpu.memory_space<any>>
    %c2_i32_74 = arith.constant 2 : i32
    %c0_i32_75 = arith.constant 0 : i32
    %122 = tpu.memref_slice %arg3[%c2_i32_74, %c0_i32_75] : memref<16x128xf32, #tpu.memory_space<vmem>> -> memref<1x128xf32, #tpu.memory_space<vmem>>
    %123 = tpu.memref_slice %arg4[%c2_i32_72] : memref<16x!tpu.dma_semaphore, #tpu.memory_space<semaphore_mem>> -> memref<1x!tpu.dma_semaphore, #tpu.memory_space<semaphore_mem>>
    %124 = tpu.memref_squeeze %123 : memref<1x!tpu.dma_semaphore, #tpu.memory_space<semaphore_mem>> -> memref<!tpu.dma_semaphore, #tpu.memory_space<semaphore_mem>>
    tpu.wait_dma2 semaphore(%124 : memref<!tpu.dma_semaphore, #tpu.memory_space<semaphore_mem>>) src(%121 : memref<1x128xf32, #tpu.memory_space<any>>) dst(%122 : memref<1x128xf32, #tpu.memory_space<vmem>>)
    %c3_i32_76 = arith.constant 3 : i32
    %c0_i32_77 = arith.constant 0 : i32
    %125 = tpu.memref_slice %arg2[%24, %c0_i32_77] : memref<64x128xf32, #tpu.memory_space<any>> -> memref<1x128xf32, #tpu.memory_space<any>>
    %c3_i32_78 = arith.constant 3 : i32
    %c0_i32_79 = arith.constant 0 : i32
    %126 = tpu.memref_slice %arg3[%c3_i32_78, %c0_i32_79] : memref<16x128xf32, #tpu.memory_space<vmem>> -> memref<1x128xf32, #tpu.memory_space<vmem>>
    %127 = tpu.memref_slice %arg4[%c3_i32_76] : memref<16x!tpu.dma_semaphore, #tpu.memory_space<semaphore_mem>> -> memref<1x!tpu.dma_semaphore, #tpu.memory_space<semaphore_mem>>
    %128 = tpu.memref_squeeze %127 : memref<1x!tpu.dma_semaphore, #tpu.memory_space<semaphore_mem>> -> memref<!tpu.dma_semaphore, #tpu.memory_space<semaphore_mem>>
    tpu.wait_dma2 semaphore(%128 : memref<!tpu.dma_semaphore, #tpu.memory_space<semaphore_mem>>) src(%125 : memref<1x128xf32, #tpu.memory_space<any>>) dst(%126 : memref<1x128xf32, #tpu.memory_space<vmem>>)
    %c4_i32_80 = arith.constant 4 : i32
    %c0_i32_81 = arith.constant 0 : i32
    %129 = tpu.memref_slice %arg2[%31, %c0_i32_81] : memref<64x128xf32, #tpu.memory_space<any>> -> memref<1x128xf32, #tpu.memory_space<any>>
    %c4_i32_82 = arith.constant 4 : i32
    %c0_i32_83 = arith.constant 0 : i32
    %130 = tpu.memref_slice %arg3[%c4_i32_82, %c0_i32_83] : memref<16x128xf32, #tpu.memory_space<vmem>> -> memref<1x128xf32, #tpu.memory_space<vmem>>
    %131 = tpu.memref_slice %arg4[%c4_i32_80] : memref<16x!tpu.dma_semaphore, #tpu.memory_space<semaphore_mem>> -> memref<1x!tpu.dma_semaphore, #tpu.memory_space<semaphore_mem>>
    %132 = tpu.memref_squeeze %131 : memref<1x!tpu.dma_semaphore, #tpu.memory_space<semaphore_mem>> -> memref<!tpu.dma_semaphore, #tpu.memory_space<semaphore_mem>>
    tpu.wait_dma2 semaphore(%132 : memref<!tpu.dma_semaphore, #tpu.memory_space<semaphore_mem>>) src(%129 : memref<1x128xf32, #tpu.memory_space<any>>) dst(%130 : memref<1x128xf32, #tpu.memory_space<vmem>>)
    %c5_i32_84 = arith.constant 5 : i32
    %c0_i32_85 = arith.constant 0 : i32
    %133 = tpu.memref_slice %arg2[%38, %c0_i32_85] : memref<64x128xf32, #tpu.memory_space<any>> -> memref<1x128xf32, #tpu.memory_space<any>>
    %c5_i32_86 = arith.constant 5 : i32
    %c0_i32_87 = arith.constant 0 : i32
    %134 = tpu.memref_slice %arg3[%c5_i32_86, %c0_i32_87] : memref<16x128xf32, #tpu.memory_space<vmem>> -> memref<1x128xf32, #tpu.memory_space<vmem>>
    %135 = tpu.memref_slice %arg4[%c5_i32_84] : memref<16x!tpu.dma_semaphore, #tpu.memory_space<semaphore_mem>> -> memref<1x!tpu.dma_semaphore, #tpu.memory_space<semaphore_mem>>
    %136 = tpu.memref_squeeze %135 : memref<1x!tpu.dma_semaphore, #tpu.memory_space<semaphore_mem>> -> memref<!tpu.dma_semaphore, #tpu.memory_space<semaphore_mem>>
    tpu.wait_dma2 semaphore(%136 : memref<!tpu.dma_semaphore, #tpu.memory_space<semaphore_mem>>) src(%133 : memref<1x128xf32, #tpu.memory_space<any>>) dst(%134 : memref<1x128xf32, #tpu.memory_space<vmem>>)
    %c6_i32_88 = arith.constant 6 : i32
    %c0_i32_89 = arith.constant 0 : i32
    %137 = tpu.memref_slice %arg2[%45, %c0_i32_89] : memref<64x128xf32, #tpu.memory_space<any>> -> memref<1x128xf32, #tpu.memory_space<any>>
    %c6_i32_90 = arith.constant 6 : i32
    %c0_i32_91 = arith.constant 0 : i32
    %138 = tpu.memref_slice %arg3[%c6_i32_90, %c0_i32_91] : memref<16x128xf32, #tpu.memory_space<vmem>> -> memref<1x128xf32, #tpu.memory_space<vmem>>
    %139 = tpu.memref_slice %arg4[%c6_i32_88] : memref<16x!tpu.dma_semaphore, #tpu.memory_space<semaphore_mem>> -> memref<1x!tpu.dma_semaphore, #tpu.memory_space<semaphore_mem>>
    %140 = tpu.memref_squeeze %139 : memref<1x!tpu.dma_semaphore, #tpu.memory_space<semaphore_mem>> -> memref<!tpu.dma_semaphore, #tpu.memory_space<semaphore_mem>>
    tpu.wait_dma2 semaphore(%140 : memref<!tpu.dma_semaphore, #tpu.memory_space<semaphore_mem>>) src(%137 : memref<1x128xf32, #tpu.memory_space<any>>) dst(%138 : memref<1x128xf32, #tpu.memory_space<vmem>>)
    %c7_i32_92 = arith.constant 7 : i32
    %c0_i32_93 = arith.constant 0 : i32
    %141 = tpu.memref_slice %arg2[%52, %c0_i32_93] : memref<64x128xf32, #tpu.memory_space<any>> -> memref<1x128xf32, #tpu.memory_space<any>>
    %c7_i32_94 = arith.constant 7 : i32
    %c0_i32_95 = arith.constant 0 : i32
    %142 = tpu.memref_slice %arg3[%c7_i32_94, %c0_i32_95] : memref<16x128xf32, #tpu.memory_space<vmem>> -> memref<1x128xf32, #tpu.memory_space<vmem>>
    %143 = tpu.memref_slice %arg4[%c7_i32_92] : memref<16x!tpu.dma_semaphore, #tpu.memory_space<semaphore_mem>> -> memref<1x!tpu.dma_semaphore, #tpu.memory_space<semaphore_mem>>
    %144 = tpu.memref_squeeze %143 : memref<1x!tpu.dma_semaphore, #tpu.memory_space<semaphore_mem>> -> memref<!tpu.dma_semaphore, #tpu.memory_space<semaphore_mem>>
    tpu.wait_dma2 semaphore(%144 : memref<!tpu.dma_semaphore, #tpu.memory_space<semaphore_mem>>) src(%141 : memref<1x128xf32, #tpu.memory_space<any>>) dst(%142 : memref<1x128xf32, #tpu.memory_space<vmem>>)
    %c8_i32_96 = arith.constant 8 : i32
    %c0_i32_97 = arith.constant 0 : i32
    %145 = tpu.memref_slice %arg2[%59, %c0_i32_97] : memref<64x128xf32, #tpu.memory_space<any>> -> memref<1x128xf32, #tpu.memory_space<any>>
    %c8_i32_98 = arith.constant 8 : i32
    %c0_i32_99 = arith.constant 0 : i32
    %146 = tpu.memref_slice %arg3[%c8_i32_98, %c0_i32_99] : memref<16x128xf32, #tpu.memory_space<vmem>> -> memref<1x128xf32, #tpu.memory_space<vmem>>
    %147 = tpu.memref_slice %arg4[%c8_i32_96] : memref<16x!tpu.dma_semaphore, #tpu.memory_space<semaphore_mem>> -> memref<1x!tpu.dma_semaphore, #tpu.memory_space<semaphore_mem>>
    %148 = tpu.memref_squeeze %147 : memref<1x!tpu.dma_semaphore, #tpu.memory_space<semaphore_mem>> -> memref<!tpu.dma_semaphore, #tpu.memory_space<semaphore_mem>>
    tpu.wait_dma2 semaphore(%148 : memref<!tpu.dma_semaphore, #tpu.memory_space<semaphore_mem>>) src(%145 : memref<1x128xf32, #tpu.memory_space<any>>) dst(%146 : memref<1x128xf32, #tpu.memory_space<vmem>>)
    %c9_i32_100 = arith.constant 9 : i32
    %c0_i32_101 = arith.constant 0 : i32
    %149 = tpu.memref_slice %arg2[%66, %c0_i32_101] : memref<64x128xf32, #tpu.memory_space<any>> -> memref<1x128xf32, #tpu.memory_space<any>>
    %c9_i32_102 = arith.constant 9 : i32
    %c0_i32_103 = arith.constant 0 : i32
    %150 = tpu.memref_slice %arg3[%c9_i32_102, %c0_i32_103] : memref<16x128xf32, #tpu.memory_space<vmem>> -> memref<1x128xf32, #tpu.memory_space<vmem>>
    %151 = tpu.memref_slice %arg4[%c9_i32_100] : memref<16x!tpu.dma_semaphore, #tpu.memory_space<semaphore_mem>> -> memref<1x!tpu.dma_semaphore, #tpu.memory_space<semaphore_mem>>
    %152 = tpu.memref_squeeze %151 : memref<1x!tpu.dma_semaphore, #tpu.memory_space<semaphore_mem>> -> memref<!tpu.dma_semaphore, #tpu.memory_space<semaphore_mem>>
    tpu.wait_dma2 semaphore(%152 : memref<!tpu.dma_semaphore, #tpu.memory_space<semaphore_mem>>) src(%149 : memref<1x128xf32, #tpu.memory_space<any>>) dst(%150 : memref<1x128xf32, #tpu.memory_space<vmem>>)
    %c10_i32_104 = arith.constant 10 : i32
    %c0_i32_105 = arith.constant 0 : i32
    %153 = tpu.memref_slice %arg2[%73, %c0_i32_105] : memref<64x128xf32, #tpu.memory_space<any>> -> memref<1x128xf32, #tpu.memory_space<any>>
    %c10_i32_106 = arith.constant 10 : i32
    %c0_i32_107 = arith.constant 0 : i32
    %154 = tpu.memref_slice %arg3[%c10_i32_106, %c0_i32_107] : memref<16x128xf32, #tpu.memory_space<vmem>> -> memref<1x128xf32, #tpu.memory_space<vmem>>
    %155 = tpu.memref_slice %arg4[%c10_i32_104] : memref<16x!tpu.dma_semaphore, #tpu.memory_space<semaphore_mem>> -> memref<1x!tpu.dma_semaphore, #tpu.memory_space<semaphore_mem>>
    %156 = tpu.memref_squeeze %155 : memref<1x!tpu.dma_semaphore, #tpu.memory_space<semaphore_mem>> -> memref<!tpu.dma_semaphore, #tpu.memory_space<semaphore_mem>>
    tpu.wait_dma2 semaphore(%156 : memref<!tpu.dma_semaphore, #tpu.memory_space<semaphore_mem>>) src(%153 : memref<1x128xf32, #tpu.memory_space<any>>) dst(%154 : memref<1x128xf32, #tpu.memory_space<vmem>>)
    %c11_i32_108 = arith.constant 11 : i32
    %c0_i32_109 = arith.constant 0 : i32
    %157 = tpu.memref_slice %arg2[%80, %c0_i32_109] : memref<64x128xf32, #tpu.memory_space<any>> -> memref<1x128xf32, #tpu.memory_space<any>>
    %c11_i32_110 = arith.constant 11 : i32
    %c0_i32_111 = arith.constant 0 : i32
    %158 = tpu.memref_slice %arg3[%c11_i32_110, %c0_i32_111] : memref<16x128xf32, #tpu.memory_space<vmem>> -> memref<1x128xf32, #tpu.memory_space<vmem>>
    %159 = tpu.memref_slice %arg4[%c11_i32_108] : memref<16x!tpu.dma_semaphore, #tpu.memory_space<semaphore_mem>> -> memref<1x!tpu.dma_semaphore, #tpu.memory_space<semaphore_mem>>
    %160 = tpu.memref_squeeze %159 : memref<1x!tpu.dma_semaphore, #tpu.memory_space<semaphore_mem>> -> memref<!tpu.dma_semaphore, #tpu.memory_space<semaphore_mem>>
    tpu.wait_dma2 semaphore(%160 : memref<!tpu.dma_semaphore, #tpu.memory_space<semaphore_mem>>) src(%157 : memref<1x128xf32, #tpu.memory_space<any>>) dst(%158 : memref<1x128xf32, #tpu.memory_space<vmem>>)
    %c12_i32_112 = arith.constant 12 : i32
    %c0_i32_113 = arith.constant 0 : i32
    %161 = tpu.memref_slice %arg2[%87, %c0_i32_113] : memref<64x128xf32, #tpu.memory_space<any>> -> memref<1x128xf32, #tpu.memory_space<any>>
    %c12_i32_114 = arith.constant 12 : i32
    %c0_i32_115 = arith.constant 0 : i32
    %162 = tpu.memref_slice %arg3[%c12_i32_114, %c0_i32_115] : memref<16x128xf32, #tpu.memory_space<vmem>> -> memref<1x128xf32, #tpu.memory_space<vmem>>
    %163 = tpu.memref_slice %arg4[%c12_i32_112] : memref<16x!tpu.dma_semaphore, #tpu.memory_space<semaphore_mem>> -> memref<1x!tpu.dma_semaphore, #tpu.memory_space<semaphore_mem>>
    %164 = tpu.memref_squeeze %163 : memref<1x!tpu.dma_semaphore, #tpu.memory_space<semaphore_mem>> -> memref<!tpu.dma_semaphore, #tpu.memory_space<semaphore_mem>>
    tpu.wait_dma2 semaphore(%164 : memref<!tpu.dma_semaphore, #tpu.memory_space<semaphore_mem>>) src(%161 : memref<1x128xf32, #tpu.memory_space<any>>) dst(%162 : memref<1x128xf32, #tpu.memory_space<vmem>>)
    %c13_i32_116 = arith.constant 13 : i32
    %c0_i32_117 = arith.constant 0 : i32
    %165 = tpu.memref_slice %arg2[%94, %c0_i32_117] : memref<64x128xf32, #tpu.memory_space<any>> -> memref<1x128xf32, #tpu.memory_space<any>>
    %c13_i32_118 = arith.constant 13 : i32
    %c0_i32_119 = arith.constant 0 : i32
    %166 = tpu.memref_slice %arg3[%c13_i32_118, %c0_i32_119] : memref<16x128xf32, #tpu.memory_space<vmem>> -> memref<1x128xf32, #tpu.memory_space<vmem>>
    %167 = tpu.memref_slice %arg4[%c13_i32_116] : memref<16x!tpu.dma_semaphore, #tpu.memory_space<semaphore_mem>> -> memref<1x!tpu.dma_semaphore, #tpu.memory_space<semaphore_mem>>
    %168 = tpu.memref_squeeze %167 : memref<1x!tpu.dma_semaphore, #tpu.memory_space<semaphore_mem>> -> memref<!tpu.dma_semaphore, #tpu.memory_space<semaphore_mem>>
    tpu.wait_dma2 semaphore(%168 : memref<!tpu.dma_semaphore, #tpu.memory_space<semaphore_mem>>) src(%165 : memref<1x128xf32, #tpu.memory_space<any>>) dst(%166 : memref<1x128xf32, #tpu.memory_space<vmem>>)
    %c14_i32_120 = arith.constant 14 : i32
    %c0_i32_121 = arith.constant 0 : i32
    %169 = tpu.memref_slice %arg2[%101, %c0_i32_121] : memref<64x128xf32, #tpu.memory_space<any>> -> memref<1x128xf32, #tpu.memory_space<any>>
    %c14_i32_122 = arith.constant 14 : i32
    %c0_i32_123 = arith.constant 0 : i32
    %170 = tpu.memref_slice %arg3[%c14_i32_122, %c0_i32_123] : memref<16x128xf32, #tpu.memory_space<vmem>> -> memref<1x128xf32, #tpu.memory_space<vmem>>
    %171 = tpu.memref_slice %arg4[%c14_i32_120] : memref<16x!tpu.dma_semaphore, #tpu.memory_space<semaphore_mem>> -> memref<1x!tpu.dma_semaphore, #tpu.memory_space<semaphore_mem>>
    %172 = tpu.memref_squeeze %171 : memref<1x!tpu.dma_semaphore, #tpu.memory_space<semaphore_mem>> -> memref<!tpu.dma_semaphore, #tpu.memory_space<semaphore_mem>>
    tpu.wait_dma2 semaphore(%172 : memref<!tpu.dma_semaphore, #tpu.memory_space<semaphore_mem>>) src(%169 : memref<1x128xf32, #tpu.memory_space<any>>) dst(%170 : memref<1x128xf32, #tpu.memory_space<vmem>>)
    %c15_i32_124 = arith.constant 15 : i32
    %c0_i32_125 = arith.constant 0 : i32
    %173 = tpu.memref_slice %arg2[%108, %c0_i32_125] : memref<64x128xf32, #tpu.memory_space<any>> -> memref<1x128xf32, #tpu.memory_space<any>>
    %c15_i32_126 = arith.constant 15 : i32
    %c0_i32_127 = arith.constant 0 : i32
    %174 = tpu.memref_slice %arg3[%c15_i32_126, %c0_i32_127] : memref<16x128xf32, #tpu.memory_space<vmem>> -> memref<1x128xf32, #tpu.memory_space<vmem>>
    %175 = tpu.memref_slice %arg4[%c15_i32_124] : memref<16x!tpu.dma_semaphore, #tpu.memory_space<semaphore_mem>> -> memref<1x!tpu.dma_semaphore, #tpu.memory_space<semaphore_mem>>
    %176 = tpu.memref_squeeze %175 : memref<1x!tpu.dma_semaphore, #tpu.memory_space<semaphore_mem>> -> memref<!tpu.dma_semaphore, #tpu.memory_space<semaphore_mem>>
    tpu.wait_dma2 semaphore(%176 : memref<!tpu.dma_semaphore, #tpu.memory_space<semaphore_mem>>) src(%173 : memref<1x128xf32, #tpu.memory_space<any>>) dst(%174 : memref<1x128xf32, #tpu.memory_space<vmem>>)
    return
  }
  func.func @transform_1(%arg0: i32, %arg1: memref<16xi32, #tpu.memory_space<smem>>) -> (i32, i32) {
    %c0_i32 = arith.constant 0 : i32
    %c0_i32_0 = arith.constant 0 : i32
    return %arg0, %c0_i32 : i32, i32
  }
}

</mosaic_0001>

<llo_original>
// kernel: tpu_custom_call.1
$region0: #{tpu_custom_call.1}
  #allocation0 [shape = 'u32[]', space=smem, size = 0x4, offset = 0x4, fixed_abs, tag = 'smem constant byte address 0x4 - core index']
  #allocation1 [shape = 'u32[72,128]{1,0:T(1,128)}', space=vmem, size = 0x9000, scoped, tag = 'internal scratch']
  #allocation2 [shape = 's32[16]{0}', space=sflag, size = 0x40, scoped, tag = 'scratch operand']
  #allocation3 [shape = 's32[1]{0}', space=sflag, size = 0x4, scoped, tag = 'scoped memory for tpu_custom_call.1']
  #allocation4 [shape = 'u8[512]{0}', space=smem, size = 0x200, scoped, tag = 'prefetched SMEM operand 0']
  #allocation7 [shape = 's32[]', space=sflag, size = 0x4, offset = 0, fixed_abs, tag = 'sflag constant byte address 0x0 - dummy sync flag']
  #allocation8 [shape = 's32[]', space=sflag, size = 0x4, offset = 0, fixed_abs, tag = 'sflag constant byte address 0x0 - dummy sync flag']
  #allocation9 [shape = 'u32[]', space=smem, size = 0x4, offset = 0x44, fixed_abs, tag = 'smem constant byte address 0x44 - assertion arg 0']
  #allocation10 [shape = 'u32[]', space=smem, size = 0x4, offset = 0x48, fixed_abs, tag = 'smem constant byte address 0x48 - assertion arg 1']
  #allocation11 [shape = 's32[]', space=sflag, size = 0x4, offset = 0, fixed_abs, tag = 'sflag constant byte address 0x0 - dummy sync flag']
  #allocation12 [shape = 's32[]', space=sflag, size = 0x4, offset = 0, fixed_abs, tag = 'sflag constant byte address 0x0 - dummy sync flag']
  #allocation13 [shape = 's32[]', space=sflag, size = 0x4, offset = 0, fixed_abs, tag = 'sflag constant byte address 0x0 - dummy sync flag']
  #allocation14 [shape = 's32[]', space=sflag, size = 0x4, offset = 0, fixed_abs, tag = 'sflag constant byte address 0x0 - dummy sync flag']
  #allocation15 [shape = 's32[]', space=sflag, size = 0x4, offset = 0, fixed_abs, tag = 'sflag constant byte address 0x0 - dummy sync flag']
  #allocation16 [shape = 's32[]', space=sflag, size = 0x4, offset = 0, fixed_abs, tag = 'sflag constant byte address 0x0 - dummy sync flag']
  #allocation17 [shape = 's32[]', space=sflag, size = 0x4, offset = 0, fixed_abs, tag = 'sflag constant byte address 0x0 - dummy sync flag']
  #allocation18 [shape = 's32[]', space=sflag, size = 0x4, offset = 0, fixed_abs, tag = 'sflag constant byte address 0x0 - dummy sync flag']
  #allocation19 [shape = 's32[]', space=sflag, size = 0x4, offset = 0, fixed_abs, tag = 'sflag constant byte address 0x0 - dummy sync flag']
  #allocation20 [shape = 's32[]', space=sflag, size = 0x4, offset = 0, fixed_abs, tag = 'sflag constant byte address 0x0 - dummy sync flag']
  #allocation21 [shape = 's32[]', space=sflag, size = 0x4, offset = 0, fixed_abs, tag = 'sflag constant byte address 0x0 - dummy sync flag']
  #allocation22 [shape = 's32[]', space=sflag, size = 0x4, offset = 0, fixed_abs, tag = 'sflag constant byte address 0x0 - dummy sync flag']
  #allocation23 [shape = 's32[]', space=sflag, size = 0x4, offset = 0, fixed_abs, tag = 'sflag constant byte address 0x0 - dummy sync flag']
  #allocation24 [shape = 's32[]', space=sflag, size = 0x4, offset = 0, fixed_abs, tag = 'sflag constant byte address 0x0 - dummy sync flag']
  #allocation25 [shape = 's32[]', space=sflag, size = 0x4, offset = 0, fixed_abs, tag = 'sflag constant byte address 0x0 - dummy sync flag']
  #allocation26 [shape = 's32[]', space=sflag, size = 0x4, offset = 0, fixed_abs, tag = 'sflag constant byte address 0x0 - dummy sync flag']
  #allocation27 [shape = 's32[]', space=sflag, size = 0x4, offset = 0, fixed_abs, tag = 'sflag constant byte address 0x0 - dummy sync flag']
  #allocation28 [shape = 's32[]', space=sflag, size = 0x4, offset = 0, fixed_abs, tag = 'sflag constant byte address 0x0 - dummy sync flag']
  #allocation29 [shape = 's32[]', space=sflag, size = 0x4, offset = 0, fixed_abs, tag = 'sflag constant byte address 0x0 - dummy sync flag']
  #allocation30 [shape = 's32[]', space=sflag, size = 0x4, offset = 0, fixed_abs, tag = 'sflag constant byte address 0x0 - dummy sync flag']
  #allocation31 [shape = 's32[]', space=sflag, size = 0x4, offset = 0, fixed_abs, tag = 'sflag constant byte address 0x0 - dummy sync flag']
  #allocation32 [shape = 's32[]', space=sflag, size = 0x4, offset = 0, fixed_abs, tag = 'sflag constant byte address 0x0 - dummy sync flag']
  #allocation33 [shape = 's32[]', space=sflag, size = 0x4, offset = 0, fixed_abs, tag = 'sflag constant byte address 0x0 - dummy sync flag']
  #allocation34 [shape = 's32[]', space=sflag, size = 0x4, offset = 0, fixed_abs, tag = 'sflag constant byte address 0x0 - dummy sync flag']
  #allocation35 [shape = 's32[]', space=sflag, size = 0x4, offset = 0, fixed_abs, tag = 'sflag constant byte address 0x0 - dummy sync flag']
  #allocation36 [shape = 's32[]', space=sflag, size = 0x4, offset = 0, fixed_abs, tag = 'sflag constant byte address 0x0 - dummy sync flag']
  #allocation37 [shape = 's32[]', space=sflag, size = 0x4, offset = 0, fixed_abs, tag = 'sflag constant byte address 0x0 - dummy sync flag']
  #allocation38 [shape = 's32[]', space=sflag, size = 0x4, offset = 0, fixed_abs, tag = 'sflag constant byte address 0x0 - dummy sync flag']
  #allocation39 [shape = 's32[]', space=sflag, size = 0x4, offset = 0, fixed_abs, tag = 'sflag constant byte address 0x0 - dummy sync flag']
  #allocation40 [shape = 's32[]', space=sflag, size = 0x4, offset = 0, fixed_abs, tag = 'sflag constant byte address 0x0 - dummy sync flag']
  %s0 = inlined_call_operand.hbm [shape: s32[16], index: 0, kind: input, shape index: {}]
  %s1 = inlined_call_operand.hbm [shape: f32[64,128], index: 1, kind: input, shape index: {}]
  %s2 = inlined_call_operand.hbm [shape: f32[16,128], index: 2, kind: output, shape index: {}]
  %s3 = sld [smem:[#allocation0]]
  $region74: #{tpu_custom_call.1} parent=0
    _
  %s5 = ssub.s32 1, %s3
  %s6 = scalar_select 0, %s5, %s3
  %s8 = sshll.u32 %s0, 4
  %s9 = int_to_ptr.hbm [resolvable:$true] %s8
  %11 = dma.hbm_to_smem %s9, 16, [#allocation4], [#allocation3]
  %13 = dma.done [#allocation3], 16
  %14 = sfence
  $region1: #{tpu_custom_call.1} parent=0
    #allocation5 [shape = 'u8[8192]{0}', space=vmem, size = 0x2000, scoped, tag = 'output window, operand 0, single buffered']
    #allocation6 [shape = 's32[1]{0}', space=sflag, size = 0x4, scoped, tag = 'scoped memory for tpu_custom_call.1']
    %15 = vsyncpa [#allocation6], 0
    %s16 = smul.u32 0, 16
    %s17 = sld [smem:[#allocation4 + %s16]]
    %s18 = scalar_lea.hbm %s1, %s17
    // Predicated region
    $region2: #{tpu_custom_call.1} parent=1 // pred_check
      _
    $region3: #{tpu_custom_call.1} parent=1 // pred_check_branch
      %20 = sbr.rel target = $region5
    $region4: #{tpu_custom_call.1} parent=1 // pred_region
      %21 = sst [smem:[#allocation9]] [#allocation8]
      %22 = sst [smem:[#allocation10]] [#allocation7]
    $region5: #{tpu_custom_call.1} parent=1 // pred_fallthru
      _
    %24 = shalt.err (0)
    %s26 = sshll.u32 %s18, 4
    %s27 = int_to_ptr.hbm [resolvable:$true] %s26
    %s28 = sshll.u32 [#allocation5], 4
    %s29 = int_to_ptr.vmem [resolvable:$true] %s28
    %31 = dma.hbm_to_vmem [thread:$0]  %s27, 16, %s29, [#allocation2]
    %s32 = sadd.s32 %s16, 1
    %s33 = sld [smem:[#allocation4 + %s32]]
    %s34 = scalar_lea.hbm %s1, %s33
    %s35 = scalar_lea.vmem [#allocation5], 1
    %s36 = scalar_lea.sflag [#allocation2], 1
    // Predicated region
    $region6: #{tpu_custom_call.1} parent=1 // pred_check
      _
    $region7: #{tpu_custom_call.1} parent=1 // pred_check_branch
      %38 = sbr.rel target = $region9
    $region8: #{tpu_custom_call.1} parent=1 // pred_region
      %39 = sst [smem:[#allocation9]] [#allocation12]
      %40 = sst [smem:[#allocation10]] [#allocation11]
    $region9: #{tpu_custom_call.1} parent=1 // pred_fallthru
      _
    %42 = shalt.err (0)
    %s44 = sshll.u32 %s34, 4
    %s45 = int_to_ptr.hbm [resolvable:$true] %s44
    %s46 = sshll.u32 %s35, 4
    %s47 = int_to_ptr.vmem [resolvable:$true] %s46
    %49 = dma.hbm_to_vmem [thread:$0]  %s45, 16, %s47, %s36
    %s50 = sadd.s32 %s16, 2
    %s51 = sld [smem:[#allocation4 + %s50]]
    %s52 = scalar_lea.hbm %s1, %s51
    %s53 = scalar_lea.vmem [#allocation5], 2
    %s54 = scalar_lea.sflag [#allocation2], 2
    // Predicated region
    $region10: #{tpu_custom_call.1} parent=1 // pred_check
      _
    $region11: #{tpu_custom_call.1} parent=1 // pred_check_branch
      %56 = sbr.rel target = $region13
    $region12: #{tpu_custom_call.1} parent=1 // pred_region
      %57 = sst [smem:[#allocation9]] [#allocation14]
      %58 = sst [smem:[#allocation10]] [#allocation13]
    $region13: #{tpu_custom_call.1} parent=1 // pred_fallthru
      _
    %60 = shalt.err (0)
    %s62 = sshll.u32 %s52, 4
    %s63 = int_to_ptr.hbm [resolvable:$true] %s62
    %s64 = sshll.u32 %s53, 4
    %s65 = int_to_ptr.vmem [resolvable:$true] %s64
    %67 = dma.hbm_to_vmem [thread:$0]  %s63, 16, %s65, %s54
    %s68 = sadd.s32 %s16, 3
    %s69 = sld [smem:[#allocation4 + %s68]]
    %s70 = scalar_lea.hbm %s1, %s69
    %s71 = scalar_lea.vmem [#allocation5], 3
    %s72 = scalar_lea.sflag [#allocation2], 3
    // Predicated region
    $region14: #{tpu_custom_call.1} parent=1 // pred_check
      _
    $region15: #{tpu_custom_call.1} parent=1 // pred_check_branch
      %74 = sbr.rel target = $region17
    $region16: #{tpu_custom_call.1} parent=1 // pred_region
      %75 = sst [smem:[#allocation9]] [#allocation16]
      %76 = sst [smem:[#allocation10]] [#allocation15]
    $region17: #{tpu_custom_call.1} parent=1 // pred_fallthru
      _
    %78 = shalt.err (0)
    %s80 = sshll.u32 %s70, 4
    %s81 = int_to_ptr.hbm [resolvable:$true] %s80
    %s82 = sshll.u32 %s71, 4
    %s83 = int_to_ptr.vmem [resolvable:$true] %s82
    %85 = dma.hbm_to_vmem [thread:$0]  %s81, 16, %s83, %s72
    %s86 = sadd.s32 %s16, 4
    %s87 = sld [smem:[#allocation4 + %s86]]
    %s88 = scalar_lea.hbm %s1, %s87
    %s89 = scalar_lea.vmem [#allocation5], 4
    %s90 = scalar_lea.sflag [#allocation2], 4
    // Predicated region
    $region18: #{tpu_custom_call.1} parent=1 // pred_check
      _
    $region19: #{tpu_custom_call.1} parent=1 // pred_check_branch
      %92 = sbr.rel target = $region21
    $region20: #{tpu_custom_call.1} parent=1 // pred_region
      %93 = sst [smem:[#allocation9]] [#allocation18]
      %94 = sst [smem:[#allocation10]] [#allocation17]
    $region21: #{tpu_custom_call.1} parent=1 // pred_fallthru
      _
    %96 = shalt.err (0)
    %s98 = sshll.u32 %s88, 4
    %s99 = int_to_ptr.hbm [resolvable:$true] %s98
    %s100 = sshll.u32 %s89, 4
    %s101 = int_to_ptr.vmem [resolvable:$true] %s100
    %103 = dma.hbm_to_vmem [thread:$0]  %s99, 16, %s101, %s90
    %s104 = sadd.s32 %s16, 5
    %s105 = sld [smem:[#allocation4 + %s104]]
    %s106 = scalar_lea.hbm %s1, %s105
    %s107 = scalar_lea.vmem [#allocation5], 5
    %s108 = scalar_lea.sflag [#allocation2], 5
    // Predicated region
    $region22: #{tpu_custom_call.1} parent=1 // pred_check
      _
    $region23: #{tpu_custom_call.1} parent=1 // pred_check_branch
      %110 = sbr.rel target = $region25
    $region24: #{tpu_custom_call.1} parent=1 // pred_region
      %111 = sst [smem:[#allocation9]] [#allocation20]
      %112 = sst [smem:[#allocation10]] [#allocation19]
    $region25: #{tpu_custom_call.1} parent=1 // pred_fallthru
      _
    %114 = shalt.err (0)
    %s116 = sshll.u32 %s106, 4
    %s117 = int_to_ptr.hbm [resolvable:$true] %s116
    %s118 = sshll.u32 %s107, 4
    %s119 = int_to_ptr.vmem [resolvable:$true] %s118
    %121 = dma.hbm_to_vmem [thread:$0]  %s117, 16, %s119, %s108
    %s122 = sadd.s32 %s16, 6
    %s123 = sld [smem:[#allocation4 + %s122]]
    %s124 = scalar_lea.hbm %s1, %s123
    %s125 = scalar_lea.vmem [#allocation5], 6
    %s126 = scalar_lea.sflag [#allocation2], 6
    // Predicated region
    $region26: #{tpu_custom_call.1} parent=1 // pred_check
      _
    $region27: #{tpu_custom_call.1} parent=1 // pred_check_branch
      %128 = sbr.rel target = $region29
    $region28: #{tpu_custom_call.1} parent=1 // pred_region
      %129 = sst [smem:[#allocation9]] [#allocation22]
      %130 = sst [smem:[#allocation10]] [#allocation21]
    $region29: #{tpu_custom_call.1} parent=1 // pred_fallthru
      _
    %132 = shalt.err (0)
    %s134 = sshll.u32 %s124, 4
    %s135 = int_to_ptr.hbm [resolvable:$true] %s134
    %s136 = sshll.u32 %s125, 4
    %s137 = int_to_ptr.vmem [resolvable:$true] %s136
    %139 = dma.hbm_to_vmem [thread:$0]  %s135, 16, %s137, %s126
    %s140 = sadd.s32 %s16, 7
    %s141 = sld [smem:[#allocation4 + %s140]]
    %s142 = scalar_lea.hbm %s1, %s141
    %s143 = scalar_lea.vmem [#allocation5], 7
    %s144 = scalar_lea.sflag [#allocation2], 7
    // Predicated region
    $region30: #{tpu_custom_call.1} parent=1 // pred_check
      _
    $region31: #{tpu_custom_call.1} parent=1 // pred_check_branch
      %146 = sbr.rel target = $region33
    $region32: #{tpu_custom_call.1} parent=1 // pred_region
      %147 = sst [smem:[#allocation9]] [#allocation24]
      %148 = sst [smem:[#allocation10]] [#allocation23]
    $region33: #{tpu_custom_call.1} parent=1 // pred_fallthru
      _
    %150 = shalt.err (0)
    %s152 = sshll.u32 %s142, 4
    %s153 = int_to_ptr.hbm [resolvable:$true] %s152
    %s154 = sshll.u32 %s143, 4
    %s155 = int_to_ptr.vmem [resolvable:$true] %s154
    %157 = dma.hbm_to_vmem [thread:$0]  %s153, 16, %s155, %s144
    %s158 = sadd.s32 %s16, 8
    %s159 = sld [smem:[#allocation4 + %s158]]
    %s160 = scalar_lea.hbm %s1, %s159
    %s161 = scalar_lea.vmem [#allocation5], 8
    %s162 = scalar_lea.sflag [#allocation2], 8
    // Predicated region
    $region34: #{tpu_custom_call.1} parent=1 // pred_check
      _
    $region35: #{tpu_custom_call.1} parent=1 // pred_check_branch
      %164 = sbr.rel target = $region37
    $region36: #{tpu_custom_call.1} parent=1 // pred_region
      %165 = sst [smem:[#allocation9]] [#allocation26]
      %166 = sst [smem:[#allocation10]] [#allocation25]
    $region37: #{tpu_custom_call.1} parent=1 // pred_fallthru
      _
    %168 = shalt.err (0)
    %s170 = sshll.u32 %s160, 4
    %s171 = int_to_ptr.hbm [resolvable:$true] %s170
    %s172 = sshll.u32 %s161, 4
    %s173 = int_to_ptr.vmem [resolvable:$true] %s172
    %175 = dma.hbm_to_vmem [thread:$0]  %s171, 16, %s173, %s162
    %s176 = sadd.s32 %s16, 9
    %s177 = sld [smem:[#allocation4 + %s176]]
    %s178 = scalar_lea.hbm %s1, %s177
    %s179 = scalar_lea.vmem [#allocation5], 9
    %s180 = scalar_lea.sflag [#allocation2], 9
    // Predicated region
    $region38: #{tpu_custom_call.1} parent=1 // pred_check
      _
    $region39: #{tpu_custom_call.1} parent=1 // pred_check_branch
      %182 = sbr.rel target = $region41
    $region40: #{tpu_custom_call.1} parent=1 // pred_region
      %183 = sst [smem:[#allocation9]] [#allocation28]
      %184 = sst [smem:[#allocation10]] [#allocation27]
    $region41: #{tpu_custom_call.1} parent=1 // pred_fallthru
      _
    %186 = shalt.err (0)
    %s188 = sshll.u32 %s178, 4
    %s189 = int_to_ptr.hbm [resolvable:$true] %s188
    %s190 = sshll.u32 %s179, 4
    %s191 = int_to_ptr.vmem [resolvable:$true] %s190
    %193 = dma.hbm_to_vmem [thread:$0]  %s189, 16, %s191, %s180
    %s194 = sadd.s32 %s16, 10
    %s195 = sld [smem:[#allocation4 + %s194]]
    %s196 = scalar_lea.hbm %s1, %s195
    %s197 = scalar_lea.vmem [#allocation5], 10
    %s198 = scalar_lea.sflag [#allocation2], 10
    // Predicated region
    $region42: #{tpu_custom_call.1} parent=1 // pred_check
      _
    $region43: #{tpu_custom_call.1} parent=1 // pred_check_branch
      %200 = sbr.rel target = $region45
    $region44: #{tpu_custom_call.1} parent=1 // pred_region
      %201 = sst [smem:[#allocation9]] [#allocation30]
      %202 = sst [smem:[#allocation10]] [#allocation29]
    $region45: #{tpu_custom_call.1} parent=1 // pred_fallthru
      _
    %204 = shalt.err (0)
    %s206 = sshll.u32 %s196, 4
    %s207 = int_to_ptr.hbm [resolvable:$true] %s206
    %s208 = sshll.u32 %s197, 4
    %s209 = int_to_ptr.vmem [resolvable:$true] %s208
    %211 = dma.hbm_to_vmem [thread:$0]  %s207, 16, %s209, %s198
    %s212 = sadd.s32 %s16, 11
    %s213 = sld [smem:[#allocation4 + %s212]]
    %s214 = scalar_lea.hbm %s1, %s213
    %s215 = scalar_lea.vmem [#allocation5], 11
    %s216 = scalar_lea.sflag [#allocation2], 11
    // Predicated region
    $region46: #{tpu_custom_call.1} parent=1 // pred_check
      _
    $region47: #{tpu_custom_call.1} parent=1 // pred_check_branch
      %218 = sbr.rel target = $region49
    $region48: #{tpu_custom_call.1} parent=1 // pred_region
      %219 = sst [smem:[#allocation9]] [#allocation32]
      %220 = sst [smem:[#allocation10]] [#allocation31]
    $region49: #{tpu_custom_call.1} parent=1 // pred_fallthru
      _
    %222 = shalt.err (0)
    %s224 = sshll.u32 %s214, 4
    %s225 = int_to_ptr.hbm [resolvable:$true] %s224
    %s226 = sshll.u32 %s215, 4
    %s227 = int_to_ptr.vmem [resolvable:$true] %s226
    %229 = dma.hbm_to_vmem [thread:$0]  %s225, 16, %s227, %s216
    %s230 = sadd.s32 %s16, 12
    %s231 = sld [smem:[#allocation4 + %s230]]
    %s232 = scalar_lea.hbm %s1, %s231
    %s233 = scalar_lea.vmem [#allocation5], 12
    %s234 = scalar_lea.sflag [#allocation2], 12
    // Predicated region
    $region50: #{tpu_custom_call.1} parent=1 // pred_check
      _
    $region51: #{tpu_custom_call.1} parent=1 // pred_check_branch
      %236 = sbr.rel target = $region53
    $region52: #{tpu_custom_call.1} parent=1 // pred_region
      %237 = sst [smem:[#allocation9]] [#allocation34]
      %238 = sst [smem:[#allocation10]] [#allocation33]
    $region53: #{tpu_custom_call.1} parent=1 // pred_fallthru
      _
    %240 = shalt.err (0)
    %s242 = sshll.u32 %s232, 4
    %s243 = int_to_ptr.hbm [resolvable:$true] %s242
    %s244 = sshll.u32 %s233, 4
    %s245 = int_to_ptr.vmem [resolvable:$true] %s244
    %247 = dma.hbm_to_vmem [thread:$0]  %s243, 16, %s245, %s234
    %s248 = sadd.s32 %s16, 13
    %s249 = sld [smem:[#allocation4 + %s248]]
    %s250 = scalar_lea.hbm %s1, %s249
    %s251 = scalar_lea.vmem [#allocation5], 13
    %s252 = scalar_lea.sflag [#allocation2], 13
    // Predicated region
    $region54: #{tpu_custom_call.1} parent=1 // pred_check
      _
    $region55: #{tpu_custom_call.1} parent=1 // pred_check_branch
      %254 = sbr.rel target = $region57
    $region56: #{tpu_custom_call.1} parent=1 // pred_region
      %255 = sst [smem:[#allocation9]] [#allocation36]
      %256 = sst [smem:[#allocation10]] [#allocation35]
    $region57: #{tpu_custom_call.1} parent=1 // pred_fallthru
      _
    %258 = shalt.err (0)
    %s260 = sshll.u32 %s250, 4
    %s261 = int_to_ptr.hbm [resolvable:$true] %s260
    %s262 = sshll.u32 %s251, 4
    %s263 = int_to_ptr.vmem [resolvable:$true] %s262
    %265 = dma.hbm_to_vmem [thread:$0]  %s261, 16, %s263, %s252
    %s266 = sadd.s32 %s16, 14
    %s267 = sld [smem:[#allocation4 + %s266]]
    %s268 = scalar_lea.hbm %s1, %s267
    %s269 = scalar_lea.vmem [#allocation5], 14
    %s270 = scalar_lea.sflag [#allocation2], 14
    // Predicated region
    $region58: #{tpu_custom_call.1} parent=1 // pred_check
      _
    $region59: #{tpu_custom_call.1} parent=1 // pred_check_branch
      %272 = sbr.rel target = $region61
    $region60: #{tpu_custom_call.1} parent=1 // pred_region
      %273 = sst [smem:[#allocation9]] [#allocation38]
      %274 = sst [smem:[#allocation10]] [#allocation37]
    $region61: #{tpu_custom_call.1} parent=1 // pred_fallthru
      _
    %276 = shalt.err (0)
    %s278 = sshll.u32 %s268, 4
    %s279 = int_to_ptr.hbm [resolvable:$true] %s278
    %s280 = sshll.u32 %s269, 4
    %s281 = int_to_ptr.vmem [resolvable:$true] %s280
    %283 = dma.hbm_to_vmem [thread:$0]  %s279, 16, %s281, %s270
    %s284 = sadd.s32 %s16, 15
    %s285 = sld [smem:[#allocation4 + %s284]]
    %s286 = scalar_lea.hbm %s1, %s285
    %s287 = scalar_lea.vmem [#allocation5], 15
    %s288 = scalar_lea.sflag [#allocation2], 15
    // Predicated region
    $region62: #{tpu_custom_call.1} parent=1 // pred_check
      _
    $region63: #{tpu_custom_call.1} parent=1 // pred_check_branch
      %290 = sbr.rel target = $region65
    $region64: #{tpu_custom_call.1} parent=1 // pred_region
      %291 = sst [smem:[#allocation9]] [#allocation40]
      %292 = sst [smem:[#allocation10]] [#allocation39]
    $region65: #{tpu_custom_call.1} parent=1 // pred_fallthru
      _
    %294 = shalt.err (0)
    %s296 = sshll.u32 %s286, 4
    %s297 = int_to_ptr.hbm [resolvable:$true] %s296
    %s298 = sshll.u32 %s287, 4
    %s299 = int_to_ptr.vmem [resolvable:$true] %s298
    %301 = dma.hbm_to_vmem [thread:$0]  %s297, 16, %s299, %s288
    %s302 = smul.u32 1, 1
    %s303 = sshll.u32 %s302, 4
    %304 = dma.done [#allocation2], %s303
    %s305 = sshll.u32 %s302, 4
    %306 = dma.done %s36, %s305
    %s307 = sshll.u32 %s302, 4
    %308 = dma.done %s54, %s307
    %s309 = sshll.u32 %s302, 4
    %310 = dma.done %s72, %s309
    %s311 = sshll.u32 %s302, 4
    %312 = dma.done %s90, %s311
    %s313 = sshll.u32 %s302, 4
    %314 = dma.done %s108, %s313
    %s315 = sshll.u32 %s302, 4
    %316 = dma.done %s126, %s315
    %s317 = sshll.u32 %s302, 4
    %318 = dma.done %s144, %s317
    %s319 = sshll.u32 %s302, 4
    %320 = dma.done %s162, %s319
    %s321 = sshll.u32 %s302, 4
    %322 = dma.done %s180, %s321
    %s323 = sshll.u32 %s302, 4
    %324 = dma.done %s198, %s323
    %s325 = sshll.u32 %s302, 4
    %326 = dma.done %s216, %s325
    %s327 = sshll.u32 %s302, 4
    %328 = dma.done %s234, %s327
    %s329 = sshll.u32 %s302, 4
    %330 = dma.done %s252, %s329
    %s331 = sshll.u32 %s302, 4
    %332 = dma.done %s270, %s331
    %s333 = sshll.u32 %s302, 4
    %334 = dma.done %s288, %s333
    // Predicated region
    $region66: #{tpu_custom_call.1} parent=1 // pred_check
      _
    $region67: #{tpu_custom_call.1} parent=1 // pred_check_branch
      %336 = sbr.rel (0) target = $region69
    $region68: #{tpu_custom_call.1} parent=1 // pred_region
      %338 = vsyncadd [#allocation6], 0
      %s339 = sshll.u32 [#allocation5], 4
      %s340 = int_to_ptr.vmem [resolvable:$true] %s339
      %s341 = sshll.u32 %s2, 4
      %s342 = int_to_ptr.hbm [resolvable:$true] %s341
      %347 = dma.vmem_to_hbm [thread:$0]  %s340, 256, %s342, [#allocation6], 128, 128, 8
    $region69: #{tpu_custom_call.1} parent=1 // pred_fallthru
      _
    // Predicated region
    $region70: #{tpu_custom_call.1} parent=1 // pred_check
      _
    $region71: #{tpu_custom_call.1} parent=1 // pred_check_branch
      %349 = sbr.rel (0) target = $region73
    $region72: #{tpu_custom_call.1} parent=1 // pred_region
      %351 = dma.done [#allocation6], 256
    $region73: #{tpu_custom_call.1} parent=1 // pred_fallthru
      _
    %352 = vsyncpa [#allocation6], 1
  %353 = vsyncmov [#allocation2]
  %s354 = vpop.sfrf %353
  %p355 = scmp.eq.s32.totalorder %s354, 0
  %p356 = pneg %p355
  %358 = shalt.err (%p356)
  %s359 = scalar_lea.sflag [#allocation2], 1
  %360 = vsyncmov %s359
  %s361 = vpop.sfrf %360
  %p362 = scmp.eq.s32.totalorder %s361, 0
  %p363 = pneg %p362
  %365 = shalt.err (%p363)
  %s366 = scalar_lea.sflag [#allocation2], 2
  %367 = vsyncmov %s366
  %s368 = vpop.sfrf %367
  %p369 = scmp.eq.s32.totalorder %s368, 0
  %p370 = pneg %p369
  %372 = shalt.err (%p370)
  %s373 = scalar_lea.sflag [#allocation2], 3
  %374 = vsyncmov %s373
  %s375 = vpop.sfrf %374
  %p376 = scmp.eq.s32.totalorder %s375, 0
  %p377 = pneg %p376
  %379 = shalt.err (%p377)
  %s380 = scalar_lea.sflag [#allocation2], 4
  %381 = vsyncmov %s380
  %s382 = vpop.sfrf %381
  %p383 = scmp.eq.s32.totalorder %s382, 0
  %p384 = pneg %p383
  %386 = shalt.err (%p384)
  %s387 = scalar_lea.sflag [#allocation2], 5
  %388 = vsyncmov %s387
  %s389 = vpop.sfrf %388
  %p390 = scmp.eq.s32.totalorder %s389, 0
  %p391 = pneg %p390
  %393 = shalt.err (%p391)
  %s394 = scalar_lea.sflag [#allocation2], 6
  %395 = vsyncmov %s394
  %s396 = vpop.sfrf %395
  %p397 = scmp.eq.s32.totalorder %s396, 0
  %p398 = pneg %p397
  %400 = shalt.err (%p398)
  %s401 = scalar_lea.sflag [#allocation2], 7
  %402 = vsyncmov %s401
  %s403 = vpop.sfrf %402
  %p404 = scmp.eq.s32.totalorder %s403, 0
  %p405 = pneg %p404
  %407 = shalt.err (%p405)
  %s408 = scalar_lea.sflag [#allocation2], 8
  %409 = vsyncmov %s408
  %s410 = vpop.sfrf %409
  %p411 = scmp.eq.s32.totalorder %s410, 0
  %p412 = pneg %p411
  %414 = shalt.err (%p412)
  %s415 = scalar_lea.sflag [#allocation2], 9
  %416 = vsyncmov %s415
  %s417 = vpop.sfrf %416
  %p418 = scmp.eq.s32.totalorder %s417, 0
  %p419 = pneg %p418
  %421 = shalt.err (%p419)
  %s422 = scalar_lea.sflag [#allocation2], 10
  %423 = vsyncmov %s422
  %s424 = vpop.sfrf %423
  %p425 = scmp.eq.s32.totalorder %s424, 0
  %p426 = pneg %p425
  %428 = shalt.err (%p426)
  %s429 = scalar_lea.sflag [#allocation2], 11
  %430 = vsyncmov %s429
  %s431 = vpop.sfrf %430
  %p432 = scmp.eq.s32.totalorder %s431, 0
  %p433 = pneg %p432
  %435 = shalt.err (%p433)
  %s436 = scalar_lea.sflag [#allocation2], 12
  %437 = vsyncmov %s436
  %s438 = vpop.sfrf %437
  %p439 = scmp.eq.s32.totalorder %s438, 0
  %p440 = pneg %p439
  %442 = shalt.err (%p440)
  %s443 = scalar_lea.sflag [#allocation2], 13
  %444 = vsyncmov %s443
  %s445 = vpop.sfrf %444
  %p446 = scmp.eq.s32.totalorder %s445, 0
  %p447 = pneg %p446
  %449 = shalt.err (%p447)
  %s450 = scalar_lea.sflag [#allocation2], 14
  %451 = vsyncmov %s450
  %s452 = vpop.sfrf %451
  %p453 = scmp.eq.s32.totalorder %s452, 0
  %p454 = pneg %p453
  %456 = shalt.err (%p454)
  %s457 = scalar_lea.sflag [#allocation2], 15
  %458 = vsyncmov %s457
  %s459 = vpop.sfrf %458
  %p460 = scmp.eq.s32.totalorder %s459, 0
  %p461 = pneg %p460
  %463 = shalt.err (%p461)

</llo_original>
